<compile_context>
chip_gen: v7x
topology: tpu7x:2x2x1
jax: 0.10.0
libtpu: 0.0.40
codegen_flags: <defaults>
</compile_context>

<pallas_src>
import math
import functools

import jax
import jax.numpy as jnp
from jax.experimental import pallas as pl
from jax.experimental.pallas import tpu as pltpu

_LANE = 128
_PALLAS_MIN_N = 32768  # below this, XLA fusion beats kernel launch overhead


def _distance_kernel(dr_ref, out_ref, *, r_cut):
    # dr_ref : (TR, 128)     current tile of distances
    # out_ref: (3, TR, 128)  rows = [dR, 1/dR, (cos(dR*pi/r_cut)+1)/2]
    dr = dr_ref[...]                                        # VMEM load, f32
    out_ref[0, :, :] = dr                                   # plain vst
    out_ref[1, :, :] = 1.0 / dr                             # exact divide (VPU)
    out_ref[2, :, :] = (jnp.cos(dr * (math.pi / r_cut)) + 1.0) * 0.5  # EUP + VPU


def _xla_fallback(dR, r_cut):
    oodR = 1.0 / dR
    cosdR = (jnp.cos(dR * (math.pi / r_cut)) + 1.0) * 0.5
    return jnp.stack([dR, oodR, cosdR], axis=1)


def simple_distance_layer(dR, r_cut=5.0, *, block_rows=2048,
                          lane_dense=False, use_pallas=None):
    """Pallas equivalent of SimpleDistanceLayer.forward for 1-D dR.

    lane_dense=False -> (N, 3), matching torch.stack(..., dim=1).
    lane_dense=True  -> (3, N) lane-dense layout (skips the final transpose).
    """
    assert dR.ndim == 1, "this kernel handles 1-D distance vectors"
    N = dR.shape[0]

    if use_pallas is None:
        use_pallas = N >= _PALLAS_MIN_N
    if not use_pallas:
        out = _xla_fallback(dR, r_cut)
        return out.T if lane_dense else out

    # --- 2-D full-sublane tiling -------------------------------------------
    rows_total = pl.cdiv(N, _LANE)
    # effective block rows: multiple of 8 sublanes, no larger than the problem
    tr = min(block_rows, ((rows_total + 7) // 8) * 8)
    tr = max(8, ((tr + 7) // 8) * 8)
    rows_padded = ((rows_total + tr - 1) // tr) * tr
    n_padded = rows_padded * _LANE

    pad = n_padded - N
    if pad:
        # pad with 1.0 so 1/dR stays finite on padded lanes (sliced off below)
        dr_flat = jnp.pad(dR, (0, pad), constant_values=1.0)
    else:
        dr_flat = dR
    dr2d = dr_flat.reshape(rows_padded, _LANE)

    out_3rl = pl.pallas_call(
        functools.partial(_distance_kernel, r_cut=float(r_cut)),
        out_shape=jax.ShapeDtypeStruct((3, rows_padded, _LANE), dR.dtype),
        grid_spec=pltpu.PrefetchScalarGridSpec(
            num_scalar_prefetch=0,
            grid=(rows_padded // tr,),
            in_specs=[pl.BlockSpec((tr, _LANE), lambda i: (i, 0))],
            out_specs=pl.BlockSpec((3, tr, _LANE), lambda i: (0, i, 0)),
        ),
        compiler_params=pltpu.CompilerParams(
            dimension_semantics=("parallel",)),
    )(dr2d)

    out_3n = out_3rl.reshape(3, n_padded)[:, :N]
    if lane_dense:
        return out_3n
    # match torch.stack([dR, 1/dR, cos...], dim=1) -> (N, 3)
    return out_3n.T


def _reference(dR, r_cut=5.0):
    oodR = 1.0 / dR
    cosdR = (jnp.cos(dR * math.pi / r_cut) + 1.0) / 2.0
    return jnp.stack([dR, oodR, cosdR], axis=1)


if __name__ == "__main__":
    key = jax.random.PRNGKey(0)
    k1, k2 = jax.random.split(key)

    # distances strictly positive (avoid 1/0), consistent with interatomic dR
    N = 2048
    dR = jax.random.uniform(k1, (N,), dtype=jnp.float32, minval=0.5, maxval=5.0)

    out = simple_distance_layer(dR, r_cut=5.0, use_pallas=True)
    out = jax.block_until_ready(out)
    ref = _reference(dR, r_cut=5.0)
    assert out.shape == (N, 3)
    assert jnp.allclose(out, ref, rtol=1e-6, atol=1e-6)

    # non-multiple-of-128 size exercises the padding path
    N2 = 1000
    dR2 = jax.random.uniform(k2, (N2,), dtype=jnp.float32, minval=0.5, maxval=5.0)
    out2 = jax.block_until_ready(
        simple_distance_layer(dR2, r_cut=5.0, use_pallas=True))
    assert out2.shape == (N2, 3)
    assert jnp.allclose(out2, _reference(dR2, 5.0), rtol=1e-6, atol=1e-6)

    # lane-dense (3, N) variant (skips the wrapper transpose for fused consumers)
    out_ld = jax.block_until_ready(
        simple_distance_layer(dR, r_cut=5.0, use_pallas=True, lane_dense=True))
    assert out_ld.shape == (3, N)
    assert jnp.allclose(out_ld, ref.T, rtol=1e-6, atol=1e-6)

    print("KERNEL_OK")
</pallas_src>

<mosaic_0001>
module attributes {stable_mosaic.version = 11 : i64} {
  func.func @_distance_kernel(%arg0: i32, %arg1: memref<16x128xf32, #tpu.memory_space<vmem>>, %arg2: memref<3x16x128xf32, #tpu.memory_space<vmem>>) attributes {dimension_semantics = [#tpu.dimension_semantics<parallel>], iteration_bounds = array<i64: 1>, scalar_prefetch = 0 : i64, scratch_operands = 0 : i64, tpu.core_type = #tpu.core_type<tc>, window_params = [{transform_indices = @transform_0, window_bounds = array<i64: 16, 128>}, {transform_indices = @transform_1, window_bounds = array<i64: 3, 16, 128>}]} {
    %c0 = arith.constant 0 : index
    %c0_0 = arith.constant 0 : index
    %0 = vector.load %arg1[%c0, %c0_0] : memref<16x128xf32, #tpu.memory_space<vmem>>, vector<16x128xf32>
    %c0_1 = arith.constant 0 : index
    %c0_2 = arith.constant 0 : index
    %c0_3 = arith.constant 0 : index
    %1 = vector.load %arg2[%c0_1, %c0_2, %c0_3] : memref<3x16x128xf32, #tpu.memory_space<vmem>>, vector<1x16x128xf32>
    %2 = vector.shape_cast %1 : vector<1x16x128xf32> to vector<16x128xf32>
    %3 = vector.shape_cast %0 : vector<16x128xf32> to vector<1x16x128xf32>
    tpu.vector_store %arg2[%c0_1, %c0_2, %c0_3], %3 {strides = array<i32>} : memref<3x16x128xf32, #tpu.memory_space<vmem>>, vector<1x16x128xf32>,
    %cst = arith.constant 1.000000e+00 : f32
    %4 = vector.broadcast %cst : f32 to vector<16x128xf32>
    %5 = arith.divf %4, %0 : vector<16x128xf32>
    %c1 = arith.constant 1 : index
    %c0_4 = arith.constant 0 : index
    %c0_5 = arith.constant 0 : index
    %6 = vector.load %arg2[%c1, %c0_4, %c0_5] : memref<3x16x128xf32, #tpu.memory_space<vmem>>, vector<1x16x128xf32>
    %7 = vector.shape_cast %6 : vector<1x16x128xf32> to vector<16x128xf32>
    %8 = vector.shape_cast %5 : vector<16x128xf32> to vector<1x16x128xf32>
    tpu.vector_store %arg2[%c1, %c0_4, %c0_5], %8 {strides = array<i32>} : memref<3x16x128xf32, #tpu.memory_space<vmem>>, vector<1x16x128xf32>,
    %cst_6 = arith.constant 0.628318548 : f32
    %9 = vector.broadcast %cst_6 : f32 to vector<16x128xf32>
    %10 = arith.mulf %0, %9 : vector<16x128xf32>
    %11 = math.cos %10 : vector<16x128xf32>
    %cst_7 = arith.constant 1.000000e+00 : f32
    %12 = vector.broadcast %cst_7 : f32 to vector<16x128xf32>
    %13 = arith.addf %11, %12 : vector<16x128xf32>
    %cst_8 = arith.constant 5.000000e-01 : f32
    %14 = vector.broadcast %cst_8 : f32 to vector<16x128xf32>
    %15 = arith.mulf %13, %14 : vector<16x128xf32>
    %c2 = arith.constant 2 : index
    %c0_9 = arith.constant 0 : index
    %c0_10 = arith.constant 0 : index
    %16 = vector.load %arg2[%c2, %c0_9, %c0_10] : memref<3x16x128xf32, #tpu.memory_space<vmem>>, vector<1x16x128xf32>
    %17 = vector.shape_cast %16 : vector<1x16x128xf32> to vector<16x128xf32>
    %18 = vector.shape_cast %15 : vector<16x128xf32> to vector<1x16x128xf32>
    tpu.vector_store %arg2[%c2, %c0_9, %c0_10], %18 {strides = array<i32>} : memref<3x16x128xf32, #tpu.memory_space<vmem>>, vector<1x16x128xf32>,
    return
  }
  func.func @transform_0(%arg0: i32) -> (i32, i32) {
    %c0_i32 = arith.constant 0 : i32
    %c0_i32_0 = arith.constant 0 : i32
    return %arg0, %c0_i32 : i32, i32
  }
  func.func @transform_1(%arg0: i32) -> (i32, i32, i32) {
    %c0_i32 = arith.constant 0 : i32
    %c0_i32_0 = arith.constant 0 : i32
    %c0_i32_1 = arith.constant 0 : i32
    return %c0_i32, %arg0, %c0_i32_0 : i32, i32, i32
  }
}

</mosaic_0001>

<llo_original>
// kernel: tpu_custom_call.1
$region0: #{tpu_custom_call.1}
  #allocation0 [shape = 'u32[]', space=smem, size = 0x4, offset = 0x4, fixed_abs, tag = 'smem constant byte address 0x4 - core index']
  #allocation1 [shape = 'u32[144,128]{1,0:T(1,128)}', space=vmem, size = 0x12000, scoped, tag = 'internal scratch']
  %s0 = inlined_call_operand.hbm [shape: f32[16,128], index: 0, kind: input, shape index: {}]
  %s1 = inlined_call_operand.hbm [shape: f32[3,16,128], index: 1, kind: output, shape index: {}]
  %s2 = sld [smem:[#allocation0]]
  $region18: #{tpu_custom_call.1} parent=0
    _
  %s4 = ssub.s32 1, %s2
  %s5 = scalar_select 0, %s4, %s2
  $region1: #{tpu_custom_call.1} parent=0
    #allocation2 [shape = 'u8[8192]{0}', space=vmem, size = 0x2000, scoped, tag = 'input window, operand 0, single buffered']
    #allocation3 [shape = 's32[1]{0}', space=sflag, size = 0x4, scoped, tag = 'scoped memory for tpu_custom_call.1']
    #allocation4 [shape = 's32[1]{0}', space=sflag, size = 0x4, scoped, tag = 'scoped memory for tpu_custom_call.1']
    #allocation5 [shape = 'u8[24576]{0}', space=vmem, size = 0x6000, scoped, tag = 'output window, operand 0, single buffered']
    %6 = vsyncpa [#allocation3], 0
    %7 = vsyncpa [#allocation4], 0
    // Predicated region
    $region2: #{tpu_custom_call.1} parent=1 // pred_check
      _
    $region3: #{tpu_custom_call.1} parent=1 // pred_check_branch
      %9 = sbr.rel (0) target = $region5
    $region4: #{tpu_custom_call.1} parent=1 // pred_region
      %s11 = ssub.s32 256, 256
      %12 = vsyncadd [#allocation3], %s11
      %s13 = sshll.u32 [#allocation2], 4
      %s14 = int_to_ptr.vmem [resolvable:$true] %s13
      %19 = dma.hbm_to_vmem [thread:$0]  %s0, 256, %s14, [#allocation3], 128, 128, 8
    $region5: #{tpu_custom_call.1} parent=1 // pred_fallthru
      _
    // Predicated region
    $region6: #{tpu_custom_call.1} parent=1 // pred_check
      _
    $region7: #{tpu_custom_call.1} parent=1 // pred_check_branch
      %21 = sbr.rel (0) target = $region9
    $region8: #{tpu_custom_call.1} parent=1 // pred_region
      %22 = dma.done [#allocation3], 256
    $region9: #{tpu_custom_call.1} parent=1 // pred_fallthru
      _
    %v23 = vld [vmem:[#allocation2] sm:$0xff]
    %v24 = vld [vmem:[#allocation2 + $0x8] sm:$0xff]
    %25 = vst [vmem:[#allocation5] sm:$0xff] %v23
    %26 = vst [vmem:[#allocation5 + $0x8] sm:$0xff] %v24
    %v27 = vrcp.pop %v23
    %v28 = vmul.f32 1.0, %v27
    %v29 = vrcp.pop %v24
    %v30 = vmul.f32 1.0, %v29
    %s31 = scalar_lea.vmem [#allocation5], 16
    %32 = vst [vmem:[%s31] sm:$0xff] %v28
    %33 = vst [vmem:[%s31 + $0x8] sm:$0xff] %v30
    %v34 = vmul.f32 %v23, 0.62831855
    %v35 = vmul.f32 %v24, 0.62831855
    %v36 = vand.u32 2147483647, %v34
    %vm37 = vcmp.le.f32.partialorder %v36, 0.7853982
    %vm38 = vcmp.lt.s32.totalorder %v34, 0
    %v39 = vand.u32 %v34, 2139095040
    %v40 = vshrl.u32 %v39, 23
    %v41 = vsub.s32 %v40, 127
    %v42 = vand.u32 2147483647, %v34
    %v43 = vand.u32 %v42, 8388607
    %v44 = vor.u32 %v43, 8388608
    %v45 = vsub.s32 0, %v44
    %v46 = vadd.s32 %v41, 1
    %vm47 = vcmp.gt.s32.totalorder %v46, 0
    %v48 = vsel %vm47, %v46, 0
    %v49 = vshrl.u32 %v48, 5
    %v50 = vand.u32 %v48, 31
    %v51 = vsub.s32 32, %v50
    %v52 = vshrl.u32 683565275, %v51
    %v53 = vshll.u32 683565275, %v50
    %v54 = vshrl.u32 2475754826, %v51
    %v55 = vor.u32 %v53, %v54
    %v56 = vshll.u32 2475754826, %v50
    %v57 = vshrl.u32 2131351028, %v51
    %v58 = vor.u32 %v56, %v57
    %v59 = vshll.u32 2131351028, %v50
    %v60 = vshrl.u32 2102212464, %v51
    %v61 = vor.u32 %v59, %v60
    %v62 = vshll.u32 2102212464, %v50
    %v63 = vshrl.u32 920167782, %v51
    %v64 = vor.u32 %v62, %v63
    %v65 = vshll.u32 920167782, %v50
    %v66 = vshrl.u32 1326507024, %v51
    %v67 = vor.u32 %v65, %v66
    %vm68 = vcmp.lt.s32.totalorder %v49, 1
    %vm69 = vcmp.lt.s32.totalorder %v49, 2
    %vm70 = vcmp.lt.s32.totalorder %v49, 3
    %vm71 = vcmp.lt.s32.totalorder %v49, 4
    %v72 = vsel %vm68, %v52, %v55
    %v73 = vsel %vm71, %v61, 2102212464
    %v74 = vsel %vm70, %v58, %v73
    %v75 = vsel %vm69, %v72, %v74
    %v76 = vsel %vm68, %v55, %v58
    %v77 = vsel %vm71, %v64, 920167782
    %v78 = vsel %vm70, %v61, %v77
    %v79 = vsel %vm69, %v76, %v78
    %v80 = vsel %vm68, %v58, %v61
    %v81 = vsel %vm71, %v67, 1326507024
    %v82 = vsel %vm70, %v64, %v81
    %v83 = vsel %vm69, %v80, %v82
    %v84 = vshll.u32 %v44, 8
    %v85 = vmul.u32.u64.compose %v84, %v83
    %v86 = vextract.low.u32 %v85
    %v87 = vextract.high.u32 %v85
    %v88 = vmul.u32.u64.compose %v84, %v79
    %v89 = vextract.low.u32 %v88
    %v90 = vextract.high.u32 %v88
    %v91 = vmul.u32 %v84, %v75
    %v92 = vadd.s32 %v87, %v89
    %vm93 = vc.u32 %v87, %v89
    %v94 = vadd.s32 %v90, 1
    %v95 = vsel %vm93, %v94, %v90
    %v96 = vadd.s32 %v91, %v95
    %v97 = vadd.s32 %v96, 536870912
    %v98 = vshrl.u32 %v97, 30
    %v99 = vshll.u32 %v98, 30
    %v100 = vsub.s32 %v96, %v99
    %vm101 = vcmp.lt.s32.totalorder %v100, 0
    %v102 = vsub.s32 0, %v100
    %v103 = vsel %vm101, %v102, %v100
    %v104 = vclz %v103
    %v105 = vsub.s32 %v104, 2
    %vm106 = vcmp.gt.s32.totalorder 0, %v105
    %v107 = vsel %vm106, 0, %v105
    %v108 = vsub.s32 32, %v107
    %v109 = vshll.u32 %v100, %v107
    %v110 = vshrl.u32 %v92, %v108
    %v111 = vor.u32 %v109, %v110
    %v112 = vsub.s32 4294967266, %v107
    %v113 = vadd.s32 %v112, 127
    %v114 = vshll.u32 %v113, 23
    %v115 = vor.u32 4788187, %v114
    %v116 = vand.u32 2147483647, %v115
    %v118 = vcvt.s32.f32 %v111
    %v119 = vmul.f32 %v118, %v116
    %v120 = vxor.u32 %v119, 2147483648
    %v121 = vsel %vm38, %v120, %v119
    %v122 = vsub.s32 4, %v98
    %v123 = vsel %vm38, %v122, %v98
    %v124 = vsel %vm37, %v34, %v121
    %v125 = vsel %vm37, 0, %v123
    %v126 = vcosq.f32.pop %v124
    %v127 = vsinq.f32.pop %v124
    %vm128 = vweird.f32 %v34
    %v129 = vand.u32 %v125, 3
    %vm130 = vcmp.lt.s32.totalorder %v129, 2
    %vm131 = vcmp.eq.s32.totalorder %v129, 0
    %v132 = vxor.u32 %v127, 2147483648
    %v133 = vsel %vm131, %v126, %v132
    %vm134 = vcmp.eq.s32.totalorder %v129, 2
    %v135 = vxor.u32 %v126, 2147483648
    %v136 = vsel %vm134, %v135, %v127
    %v137 = vsel %vm130, %v133, %v136
    %v138 = vsel %vm128, nan, %v137
    %v139 = vand.u32 2147483647, %v35
    %vm140 = vcmp.le.f32.partialorder %v139, 0.7853982
    %vm141 = vcmp.lt.s32.totalorder %v35, 0
    %v142 = vand.u32 %v35, 2139095040
    %v143 = vshrl.u32 %v142, 23
    %v144 = vsub.s32 %v143, 127
    %v145 = vand.u32 2147483647, %v35
    %v146 = vand.u32 %v145, 8388607
    %v147 = vor.u32 %v146, 8388608
    %v148 = vsub.s32 0, %v147
    %v149 = vadd.s32 %v144, 1
    %vm150 = vcmp.gt.s32.totalorder %v149, 0
    %v151 = vsel %vm150, %v149, 0
    %v152 = vshrl.u32 %v151, 5
    %v153 = vand.u32 %v151, 31
    %v154 = vsub.s32 32, %v153
    %v155 = vshrl.u32 683565275, %v154
    %v156 = vshll.u32 683565275, %v153
    %v157 = vshrl.u32 2475754826, %v154
    %v158 = vor.u32 %v156, %v157
    %v159 = vshll.u32 2475754826, %v153
    %v160 = vshrl.u32 2131351028, %v154
    %v161 = vor.u32 %v159, %v160
    %v162 = vshll.u32 2131351028, %v153
    %v163 = vshrl.u32 2102212464, %v154
    %v164 = vor.u32 %v162, %v163
    %v165 = vshll.u32 2102212464, %v153
    %v166 = vshrl.u32 920167782, %v154
    %v167 = vor.u32 %v165, %v166
    %v168 = vshll.u32 920167782, %v153
    %v169 = vshrl.u32 1326507024, %v154
    %v170 = vor.u32 %v168, %v169
    %vm171 = vcmp.lt.s32.totalorder %v152, 1
    %vm172 = vcmp.lt.s32.totalorder %v152, 2
    %vm173 = vcmp.lt.s32.totalorder %v152, 3
    %vm174 = vcmp.lt.s32.totalorder %v152, 4
    %v175 = vsel %vm171, %v155, %v158
    %v176 = vsel %vm174, %v164, 2102212464
    %v177 = vsel %vm173, %v161, %v176
    %v178 = vsel %vm172, %v175, %v177
    %v179 = vsel %vm171, %v158, %v161
    %v180 = vsel %vm174, %v167, 920167782
    %v181 = vsel %vm173, %v164, %v180
    %v182 = vsel %vm172, %v179, %v181
    %v183 = vsel %vm171, %v161, %v164
    %v184 = vsel %vm174, %v170, 1326507024
    %v185 = vsel %vm173, %v167, %v184
    %v186 = vsel %vm172, %v183, %v185
    %v187 = vshll.u32 %v147, 8
    %v188 = vmul.u32.u64.compose %v187, %v186
    %v189 = vextract.low.u32 %v188
    %v190 = vextract.high.u32 %v188
    %v191 = vmul.u32.u64.compose %v187, %v182
    %v192 = vextract.low.u32 %v191
    %v193 = vextract.high.u32 %v191
    %v194 = vmul.u32 %v187, %v178
    %v195 = vadd.s32 %v190, %v192
    %vm196 = vc.u32 %v190, %v192
    %v197 = vadd.s32 %v193, 1
    %v198 = vsel %vm196, %v197, %v193
    %v199 = vadd.s32 %v194, %v198
    %v200 = vadd.s32 %v199, 536870912
    %v201 = vshrl.u32 %v200, 30
    %v202 = vshll.u32 %v201, 30
    %v203 = vsub.s32 %v199, %v202
    %vm204 = vcmp.lt.s32.totalorder %v203, 0
    %v205 = vsub.s32 0, %v203
    %v206 = vsel %vm204, %v205, %v203
    %v207 = vclz %v206
    %v208 = vsub.s32 %v207, 2
    %vm209 = vcmp.gt.s32.totalorder 0, %v208
    %v210 = vsel %vm209, 0, %v208
    %v211 = vsub.s32 32, %v210
    %v212 = vshll.u32 %v203, %v210
    %v213 = vshrl.u32 %v195, %v211
    %v214 = vor.u32 %v212, %v213
    %v215 = vsub.s32 4294967266, %v210
    %v216 = vadd.s32 %v215, 127
    %v217 = vshll.u32 %v216, 23
    %v218 = vor.u32 4788187, %v217
    %v219 = vand.u32 2147483647, %v218
    %v221 = vcvt.s32.f32 %v214
    %v222 = vmul.f32 %v221, %v219
    %v223 = vxor.u32 %v222, 2147483648
    %v224 = vsel %vm141, %v223, %v222
    %v225 = vsub.s32 4, %v201
    %v226 = vsel %vm141, %v225, %v201
    %v227 = vsel %vm140, %v35, %v224
    %v228 = vsel %vm140, 0, %v226
    %v229 = vcosq.f32.pop %v227
    %v230 = vsinq.f32.pop %v227
    %vm231 = vweird.f32 %v35
    %v232 = vand.u32 %v228, 3
    %vm233 = vcmp.lt.s32.totalorder %v232, 2
    %vm234 = vcmp.eq.s32.totalorder %v232, 0
    %v235 = vxor.u32 %v230, 2147483648
    %v236 = vsel %vm234, %v229, %v235
    %vm237 = vcmp.eq.s32.totalorder %v232, 2
    %v238 = vxor.u32 %v229, 2147483648
    %v239 = vsel %vm237, %v238, %v230
    %v240 = vsel %vm233, %v236, %v239
    %v241 = vsel %vm231, nan, %v240
    %v242 = vadd.f32 %v138, 1.0
    %v243 = vadd.f32 %v241, 1.0
    %v244 = vmul.f32 %v242, 0.5
    %v245 = vmul.f32 %v243, 0.5
    %s246 = scalar_lea.vmem [#allocation5], 32
    %247 = vst [vmem:[%s246] sm:$0xff] %v244
    %248 = vst [vmem:[%s246 + $0x8] sm:$0xff] %v245
    // Predicated region
    $region10: #{tpu_custom_call.1} parent=1 // pred_check
      _
    $region11: #{tpu_custom_call.1} parent=1 // pred_check_branch
      %250 = sbr.rel (0) target = $region13
    $region12: #{tpu_custom_call.1} parent=1 // pred_region
      %s252 = ssub.s32 768, 768
      %253 = vsyncadd [#allocation4], %s252
      %s254 = sshll.u32 [#allocation5], 4
      %s255 = int_to_ptr.vmem [resolvable:$true] %s254
      %260 = dma.vmem_to_hbm [thread:$0]  %s255, 768, %s1, [#allocation4], 128, 128, 8
    $region13: #{tpu_custom_call.1} parent=1 // pred_fallthru
      _
    // Predicated region
    $region14: #{tpu_custom_call.1} parent=1 // pred_check
      _
    $region15: #{tpu_custom_call.1} parent=1 // pred_check_branch
      %262 = sbr.rel (0) target = $region17
    $region16: #{tpu_custom_call.1} parent=1 // pred_region
      %263 = dma.done [#allocation4], 768
    $region17: #{tpu_custom_call.1} parent=1 // pred_fallthru
      _
    %264 = vsyncpa [#allocation3], 1
    %265 = vsyncpa [#allocation4], 1

</llo_original>
